<compile_context>
chip_gen: v7x
topology: tpu7x:2x2x1
jax: 0.10.0
libtpu: 0.0.40
codegen_flags: <defaults>
</compile_context>

<pallas_src>
import jax
import jax.numpy as jnp
from jax.experimental import pallas as pl
from jax.experimental.pallas import tpu as pltpu

EPS = 1e-5

# Column indices into the packed (H, 8) parameter slab.
_GW1, _W1SQ, _BE1, _G2, _BE2, _W3, _B3 = 0, 1, 2, 3, 4, 5, 6


def _sigmoid(x):
    # EUP tanh instead of VALU divide: sigmoid(x) = 0.5 * tanh(x/2) + 0.5
    return 0.5 * jnp.tanh(0.5 * x) + 0.5


def sigmoid_norm_net_kernel(
    x_ref,    # (1, N)  lane-dense batch row
    p_ref,    # (H, 8)  packed per-feature parameter columns
    w2_ref,   # (H, H)  Linear(H->H) weight, torch (out, in) layout
    o_ref,    # (1, N)  lane-dense output row
):
    x = x_ref[...]                                   # (1, N)
    n = x.shape[1]
    inv_n = 1.0 / n                                  # static N -> VPU mul, no divide

    gw1  = p_ref[:, _GW1:_GW1 + 1]                   # (H, 1) = g1 * w1 (folded at init)
    w1sq = p_ref[:, _W1SQ:_W1SQ + 1]                 # (H, 1) = w1 * w1 (folded at init)
    be1  = p_ref[:, _BE1:_BE1 + 1]                   # (H, 1)
    g2   = p_ref[:, _G2:_G2 + 1]                     # (H, 1)
    be2  = p_ref[:, _BE2:_BE2 + 1]                   # (H, 1)
    w3   = p_ref[:, _W3:_W3 + 1]                     # (H, 1)
    b3   = p_ref[0:1, _B3:_B3 + 1]                   # (1, 1)

    # ---- Block 1: Linear(1->H) + BN1 + Sigmoid, folded analytically. ----
    # h1_pre[f,n] = x[n]*w1[f] + b1[f]; BN over the batch reduces to stats of x
    # itself and b1 cancels exactly:
    #   h1[f,n] = sigmoid( (x[n]-mean_x) * g1*w1 * rsqrt(w1^2*var_x+eps) + be1 )
    mean_x = jnp.sum(x, axis=1, keepdims=True) * inv_n        # (1, 1)
    xc = x - mean_x                                           # (1, N)
    var_x = jnp.sum(xc * xc, axis=1, keepdims=True) * inv_n   # (1, 1)
    scale1 = gw1 * jax.lax.rsqrt(w1sq * var_x + EPS)          # (H, 1)
    h = _sigmoid(scale1 * xc + be1)                           # (H, N) VPU broadcast FMA

    # ---- Block 2: Linear(H->H) (MXU) + BN2 + Sigmoid.  b2 cancels in BN. ----
    h = jnp.dot(w2_ref[...], h, preferred_element_type=jnp.float32)   # (H, N)
    mean2 = jnp.sum(h, axis=1, keepdims=True) * inv_n                 # (H, 1)
    hc = h - mean2                                                    # (H, N)
    var2 = jnp.sum(hc * hc, axis=1, keepdims=True) * inv_n            # (H, 1) two-pass
    h = _sigmoid(hc * (g2 * jax.lax.rsqrt(var2 + EPS)) + be2)         # (H, N)

    # ---- Final: Linear(H->1) as VPU mul + sublane reduction, then Sigmoid. ----
    out = jnp.sum(h * w3, axis=0, keepdims=True) + b3                 # (1, N)
    o_ref[...] = _sigmoid(out)                                        # lane-dense store


def sigmoid_norm_net(x, params):
    """x: (N, 1) float32. params: dict from init_params()."""
    n = x.shape[0]
    x_row = x.reshape(1, n)        # (N,1) -> (1,N): metadata-only, lane-dense input
    vmem = pl.BlockSpec(memory_space=pltpu.MemorySpace.VMEM)
    out_row = pl.pallas_call(
        sigmoid_norm_net_kernel,
        out_shape=jax.ShapeDtypeStruct((1, n), jnp.float32),
        in_specs=[vmem, vmem, vmem],
        out_specs=vmem,
    )(x_row, params["slab"], params["w2"])
    return out_row.reshape(n, 1)   # (1,N) -> (N,1): metadata-only


def init_params(key, hidden_neuron=32):
    """Deterministic synthetic init, mimicking torch's uniform(-1/sqrt(fan_in)),
    plus the packed (H, 8) parameter slab consumed by the kernel."""
    H = hidden_neuron
    k1, k2, k3, k4, k5, k6 = jax.random.split(key, 6)

    def unif(k, shape, fan_in):
        bound = 1.0 / jnp.sqrt(jnp.float32(fan_in))
        return jax.random.uniform(k, shape, jnp.float32, -bound, bound)

    # Torch-layout weights (out_features, in_features).
    w1 = unif(k1, (H, 1), 1)                 # Linear(1 -> H).weight
    b1 = unif(k2, (H,), 1)
    g1 = jnp.ones((H,), jnp.float32)
    be1 = jnp.zeros((H,), jnp.float32)
    w2 = unif(k3, (H, H), H)                 # Linear(H -> H).weight
    b2 = unif(k4, (H,), H)
    g2 = jnp.ones((H,), jnp.float32)
    be2 = jnp.zeros((H,), jnp.float32)
    w3 = unif(k5, (1, H), H)                 # Linear(H -> 1).weight
    b3 = unif(k6, (1,), H)

    # Packed parameter slab: ONE DMA at call time.  gw1 = g1*w1 and
    # w1sq = w1^2 are folded here, at init (zero runtime cost).  b1/b2 are
    # mathematically dead (cancelled by BN mean subtraction) and not packed.
    slab = jnp.zeros((H, 8), jnp.float32)
    slab = slab.at[:, _GW1].set(g1 * w1[:, 0])
    slab = slab.at[:, _W1SQ].set(w1[:, 0] * w1[:, 0])
    slab = slab.at[:, _BE1].set(be1)
    slab = slab.at[:, _G2].set(g2)
    slab = slab.at[:, _BE2].set(be2)
    slab = slab.at[:, _W3].set(w3[0, :])
    slab = slab.at[0, _B3].set(b3[0])

    return {
        "slab": slab, "w2": w2,
        # Raw parameters kept only for the pure-JAX reference check.
        "w1": w1, "b1": b1, "g1": g1, "be1": be1,
        "b2": b2, "g2": g2, "be2": be2, "w3": w3, "b3": b3,
    }


def reference_forward(x, p):
    """Pure-JAX reference of the same forward pass (training-mode BN),
    including the b1/b2 bias adds exactly as PyTorch would apply them."""
    def bn(h, g, b):
        m = jnp.mean(h, axis=0, keepdims=True)
        v = jnp.mean((h - m) ** 2, axis=0, keepdims=True)
        return (h - m) / jnp.sqrt(v + EPS) * g + b

    h = jax.nn.sigmoid(bn(x @ p["w1"].T + p["b1"], p["g1"], p["be1"]))
    h = jax.nn.sigmoid(bn(h @ p["w2"].T + p["b2"], p["g2"], p["be2"]))
    return jax.nn.sigmoid(h @ p["w3"].T + p["b3"])


if __name__ == "__main__":
    key = jax.random.PRNGKey(0)
    kx, kp = jax.random.split(key)

    N, H = 64, 32          # batch=64, hidden_neuron=32, num_layer=3
    x = jax.random.normal(kx, (N, 1), jnp.float32)
    params = init_params(kp, hidden_neuron=H)

    out = sigmoid_norm_net(x, params)
    out = jax.block_until_ready(out)

    ref = reference_forward(x, params)
    assert out.shape == (N, 1)
    assert jnp.allclose(out, ref, atol=5e-5, rtol=5e-5), (
        float(jnp.max(jnp.abs(out - ref))))

    print("KERNEL_OK")
</pallas_src>

<mosaic_0001>
module attributes {stable_mosaic.version = 11 : i64} {
  func.func @sigmoid_norm_net_kernel(%arg0: memref<1x64xf32, #tpu.memory_space<vmem>>, %arg1: memref<32x8xf32, #tpu.memory_space<vmem>>, %arg2: memref<32x32xf32, #tpu.memory_space<vmem>>, %arg3: memref<1x64xf32, #tpu.memory_space<vmem>>) attributes {dimension_semantics = [], scalar_prefetch = 0 : i64, scratch_operands = 0 : i64, tpu.core_type = #tpu.core_type<tc>} {
    %c0 = arith.constant 0 : index
    %c0_0 = arith.constant 0 : index
    %0 = vector.load %arg0[%c0, %c0_0] : memref<1x64xf32, #tpu.memory_space<vmem>>, vector<1x64xf32>
    %c0_1 = arith.constant 0 : index
    %c0_2 = arith.constant 0 : index
    %1 = vector.load %arg1[%c0_1, %c0_2] : memref<32x8xf32, #tpu.memory_space<vmem>>, vector<32x1xf32>
    %c0_3 = arith.constant 0 : index
    %c1 = arith.constant 1 : index
    %2 = vector.load %arg1[%c0_3, %c1] : memref<32x8xf32, #tpu.memory_space<vmem>>, vector<32x1xf32>
    %c0_4 = arith.constant 0 : index
    %c2 = arith.constant 2 : index
    %3 = vector.load %arg1[%c0_4, %c2] : memref<32x8xf32, #tpu.memory_space<vmem>>, vector<32x1xf32>
    %c0_5 = arith.constant 0 : index
    %c3 = arith.constant 3 : index
    %4 = vector.load %arg1[%c0_5, %c3] : memref<32x8xf32, #tpu.memory_space<vmem>>, vector<32x1xf32>
    %c0_6 = arith.constant 0 : index
    %c4 = arith.constant 4 : index
    %5 = vector.load %arg1[%c0_6, %c4] : memref<32x8xf32, #tpu.memory_space<vmem>>, vector<32x1xf32>
    %c0_7 = arith.constant 0 : index
    %c5 = arith.constant 5 : index
    %6 = vector.load %arg1[%c0_7, %c5] : memref<32x8xf32, #tpu.memory_space<vmem>>, vector<32x1xf32>
    %c0_8 = arith.constant 0 : index
    %c6 = arith.constant 6 : index
    %7 = vector.load %arg1[%c0_8, %c6] : memref<32x8xf32, #tpu.memory_space<vmem>>, vector<1x1xf32>
    %cst = arith.constant dense<0.000000e+00> : vector<1xf32>
    %8 = vector.multi_reduction <add>, %0, %cst [1] : vector<1x64xf32> to vector<1xf32>
    %9 = vector.shape_cast %8 : vector<1xf32> to vector<1x1xf32>
    %cst_9 = arith.constant 1.562500e-02 : f32
    %10 = vector.broadcast %cst_9 : f32 to vector<1x1xf32>
    %11 = arith.mulf %9, %10 : vector<1x1xf32>
    %12 = vector.broadcast %11 : vector<1x1xf32> to vector<1x64xf32>
    %13 = arith.subf %0, %12 : vector<1x64xf32>
    %14 = arith.mulf %13, %13 : vector<1x64xf32>
    %cst_10 = arith.constant dense<0.000000e+00> : vector<1xf32>
    %15 = vector.multi_reduction <add>, %14, %cst_10 [1] : vector<1x64xf32> to vector<1xf32>
    %16 = vector.shape_cast %15 : vector<1xf32> to vector<1x1xf32>
    %cst_11 = arith.constant 1.562500e-02 : f32
    %17 = vector.broadcast %cst_11 : f32 to vector<1x1xf32>
    %18 = arith.mulf %16, %17 : vector<1x1xf32>
    %19 = vector.broadcast %18 : vector<1x1xf32> to vector<32x1xf32>
    %20 = arith.mulf %2, %19 : vector<32x1xf32>
    %cst_12 = arith.constant 9.99999974E-6 : f32
    %21 = vector.broadcast %cst_12 : f32 to vector<32x1xf32>
    %22 = arith.addf %20, %21 : vector<32x1xf32>
    %23 = math.rsqrt %22 : vector<32x1xf32>
    %24 = arith.mulf %1, %23 : vector<32x1xf32>
    %25 = vector.broadcast %24 : vector<32x1xf32> to vector<32x64xf32>
    %26 = vector.broadcast %13 : vector<1x64xf32> to vector<32x64xf32>
    %27 = arith.mulf %25, %26 : vector<32x64xf32>
    %28 = vector.broadcast %3 : vector<32x1xf32> to vector<32x64xf32>
    %29 = arith.addf %27, %28 : vector<32x64xf32>
    %cst_13 = arith.constant 5.000000e-01 : f32
    %30 = vector.broadcast %cst_13 : f32 to vector<32x64xf32>
    %31 = arith.mulf %30, %29 : vector<32x64xf32>
    %32 = math.tanh %31 : vector<32x64xf32>
    %cst_14 = arith.constant 5.000000e-01 : f32
    %33 = vector.broadcast %cst_14 : f32 to vector<32x64xf32>
    %34 = arith.mulf %33, %32 : vector<32x64xf32>
    %cst_15 = arith.constant 5.000000e-01 : f32
    %35 = vector.broadcast %cst_15 : f32 to vector<32x64xf32>
    %36 = arith.addf %34, %35 : vector<32x64xf32>
    %c0_16 = arith.constant 0 : index
    %c0_17 = arith.constant 0 : index
    %37 = vector.load %arg2[%c0_16, %c0_17] : memref<32x32xf32, #tpu.memory_space<vmem>>, vector<32x32xf32>
    %cst_18 = arith.constant dense<0.000000e+00> : vector<32x64xf32>
    %38 = tpu.matmul %37, %36, %cst_18 {dimension_numbers = #tpu.dot_dimension_numbers<[1], [0], [0], [1], [0, 0, 1, 1], [], []>} : vector<32x32xf32>, vector<32x64xf32>, vector<32x64xf32> -> vector<32x64xf32>
    %cst_19 = arith.constant dense<0.000000e+00> : vector<32xf32>
    %39 = vector.multi_reduction <add>, %38, %cst_19 [1] : vector<32x64xf32> to vector<32xf32>
    %40 = vector.shape_cast %39 : vector<32xf32> to vector<32x1xf32>
    %cst_20 = arith.constant 1.562500e-02 : f32
    %41 = vector.broadcast %cst_20 : f32 to vector<32x1xf32>
    %42 = arith.mulf %40, %41 : vector<32x1xf32>
    %43 = vector.broadcast %42 : vector<32x1xf32> to vector<32x64xf32>
    %44 = arith.subf %38, %43 : vector<32x64xf32>
    %45 = arith.mulf %44, %44 : vector<32x64xf32>
    %cst_21 = arith.constant dense<0.000000e+00> : vector<32xf32>
    %46 = vector.multi_reduction <add>, %45, %cst_21 [1] : vector<32x64xf32> to vector<32xf32>
    %47 = vector.shape_cast %46 : vector<32xf32> to vector<32x1xf32>
    %cst_22 = arith.constant 1.562500e-02 : f32
    %48 = vector.broadcast %cst_22 : f32 to vector<32x1xf32>
    %49 = arith.mulf %47, %48 : vector<32x1xf32>
    %cst_23 = arith.constant 9.99999974E-6 : f32
    %50 = vector.broadcast %cst_23 : f32 to vector<32x1xf32>
    %51 = arith.addf %49, %50 : vector<32x1xf32>
    %52 = math.rsqrt %51 : vector<32x1xf32>
    %53 = arith.mulf %4, %52 : vector<32x1xf32>
    %54 = vector.broadcast %53 : vector<32x1xf32> to vector<32x64xf32>
    %55 = arith.mulf %44, %54 : vector<32x64xf32>
    %56 = vector.broadcast %5 : vector<32x1xf32> to vector<32x64xf32>
    %57 = arith.addf %55, %56 : vector<32x64xf32>
    %cst_24 = arith.constant 5.000000e-01 : f32
    %58 = vector.broadcast %cst_24 : f32 to vector<32x64xf32>
    %59 = arith.mulf %58, %57 : vector<32x64xf32>
    %60 = math.tanh %59 : vector<32x64xf32>
    %cst_25 = arith.constant 5.000000e-01 : f32
    %61 = vector.broadcast %cst_25 : f32 to vector<32x64xf32>
    %62 = arith.mulf %61, %60 : vector<32x64xf32>
    %cst_26 = arith.constant 5.000000e-01 : f32
    %63 = vector.broadcast %cst_26 : f32 to vector<32x64xf32>
    %64 = arith.addf %62, %63 : vector<32x64xf32>
    %65 = vector.broadcast %6 : vector<32x1xf32> to vector<32x64xf32>
    %66 = arith.mulf %64, %65 : vector<32x64xf32>
    %cst_27 = arith.constant dense<0.000000e+00> : vector<64xf32>
    %67 = vector.multi_reduction <add>, %66, %cst_27 [0] : vector<32x64xf32> to vector<64xf32>
    %68 = vector.shape_cast %67 : vector<64xf32> to vector<1x64xf32>
    %69 = vector.broadcast %7 : vector<1x1xf32> to vector<1x64xf32>
    %70 = arith.addf %68, %69 : vector<1x64xf32>
    %cst_28 = arith.constant 5.000000e-01 : f32
    %71 = vector.broadcast %cst_28 : f32 to vector<1x64xf32>
    %72 = arith.mulf %71, %70 : vector<1x64xf32>
    %73 = math.tanh %72 : vector<1x64xf32>
    %cst_29 = arith.constant 5.000000e-01 : f32
    %74 = vector.broadcast %cst_29 : f32 to vector<1x64xf32>
    %75 = arith.mulf %74, %73 : vector<1x64xf32>
    %cst_30 = arith.constant 5.000000e-01 : f32
    %76 = vector.broadcast %cst_30 : f32 to vector<1x64xf32>
    %77 = arith.addf %75, %76 : vector<1x64xf32>
    %c0_31 = arith.constant 0 : index
    %c0_32 = arith.constant 0 : index
    %78 = vector.load %arg3[%c0_31, %c0_32] : memref<1x64xf32, #tpu.memory_space<vmem>>, vector<1x64xf32>
    tpu.vector_store %arg3[%c0_31, %c0_32], %77 {strides = array<i32>} : memref<1x64xf32, #tpu.memory_space<vmem>>, vector<1x64xf32>,
    return
  }
}

</mosaic_0001>

<llo_original>
// kernel: tpu_custom_call.1
$region0: #{tpu_custom_call.1}
  #allocation0 [shape = 'u32[]', space=smem, size = 0x4, offset = 0x4, fixed_abs, tag = 'smem constant byte address 0x4 - core index']
  #allocation1 [shape = 'u32[144,128]{1,0:T(1,128)}', space=vmem, size = 0x12000, scoped, tag = 'internal scratch']
  %s0 = inlined_call_operand.vmem [shape: f32[1,64], index: 0, kind: input, shape index: {}]
  %s1 = inlined_call_operand.vmem [shape: f32[32,8], index: 1, kind: input, shape index: {}]
  %s2 = inlined_call_operand.vmem [shape: f32[32,32], index: 2, kind: input, shape index: {}]
  %s3 = inlined_call_operand.hbm [shape: f32[1,64], index: 3, kind: output, shape index: {}]
  %s4 = sld [smem:[#allocation0]]
  $region22: #{tpu_custom_call.1} parent=0
    _
  %s6 = ssub.s32 1, %s4
  %s7 = scalar_select 0, %s6, %s4
  $region1: #{tpu_custom_call.1} parent=0
    #allocation2 [shape = 'u8[512]{0}', space=vmem, size = 0x400, scoped, tag = 'output window, operand 0, single buffered']
    #allocation3 [shape = 's32[1]{0}', space=sflag, size = 0x4, scoped, tag = 'scoped memory for tpu_custom_call.1']
    %8 = vsyncpa [#allocation3], 0
    // Predicated region
    $region2: #{tpu_custom_call.1} parent=1 // pred_check
      _
    $region3: #{tpu_custom_call.1} parent=1 // pred_check_branch
      %10 = sbr.rel (0) target = $region5
    $region4: #{tpu_custom_call.1} parent=1 // pred_region
      _
    $region5: #{tpu_custom_call.1} parent=1 // pred_fallthru
      _
    // Predicated region
    $region6: #{tpu_custom_call.1} parent=1 // pred_check
      _
    $region7: #{tpu_custom_call.1} parent=1 // pred_check_branch
      %12 = sbr.rel (0) target = $region9
    $region8: #{tpu_custom_call.1} parent=1 // pred_region
      _
    $region9: #{tpu_custom_call.1} parent=1 // pred_fallthru
      _
    // Predicated region
    $region10: #{tpu_custom_call.1} parent=1 // pred_check
      _
    $region11: #{tpu_custom_call.1} parent=1 // pred_check_branch
      %14 = sbr.rel (0) target = $region13
    $region12: #{tpu_custom_call.1} parent=1 // pred_region
      _
    $region13: #{tpu_custom_call.1} parent=1 // pred_fallthru
      _
    %v15 = vld [vmem:[%s0] sm:$0x1]
    %v16 = vld [vmem:[%s1] sm:$0xff]
    %v17 = vld [vmem:[%s1 + $0x8] sm:$0xff]
    %v18 = vld [vmem:[%s1 + $0x10] sm:$0xff]
    %v19 = vld [vmem:[%s1 + $0x18] sm:$0xff]
    %v20 = vld [vmem:[%s1] sm:$0x1]
    %vm21 = vcmask 516096
    %v22 = vsel %vm21, %v15, 0.0
    %23 = vadd.xlane.f32.xlu0 %v22
    %v24 = vpop.xlane.xlu0 %23
    %v25 = vmul.f32 %v24, 0.015625
    %v26 = vsub.f32 %v15, %v25
    %v27 = vmul.f32 %v26, %v26
    %v28 = vsel %vm21, %v27, 0.0
    %29 = vadd.xlane.f32.xlu0 %v28
    %v30 = vpop.xlane.xlu0 %29
    %v31 = vmul.f32 %v30, 0.015625
    %v32 = vlaneseq
    %v33 = vshrl.u32 %v32, 7
    %v34 = vsub.s32 0, %v33
    %v35 = vrot.slane %v31, %v34
    %v36 = vmul.f32 %v16, %v35
    %v37 = vmul.f32 %v17, %v35
    %v38 = vmul.f32 %v18, %v35
    %v39 = vmul.f32 %v19, %v35
    %v40 = vadd.f32 %v36, 1e-05
    %v41 = vadd.f32 %v37, 1e-05
    %v42 = vadd.f32 %v38, 1e-05
    %v43 = vadd.f32 %v39, 1e-05
    %v44 = vrsqrt.pop %v40
    %v45 = vrsqrt.pop %v41
    %v46 = vrsqrt.pop %v42
    %v47 = vrsqrt.pop %v43
    %52 = vrot.lane.b32.xlu0 %v44, 127
    %v53 = vpop.permute.xlu0 %52
    %54 = vrot.lane.b32.xlu0 %v45, 127
    %v55 = vpop.permute.xlu0 %54
    %56 = vrot.lane.b32.xlu0 %v46, 127
    %v57 = vpop.permute.xlu0 %56
    %58 = vrot.lane.b32.xlu0 %v47, 127
    %v59 = vpop.permute.xlu0 %58
    %v64 = vmul.f32 %v16, %v53
    %v65 = vmul.f32 %v17, %v55
    %v66 = vmul.f32 %v18, %v57
    %v67 = vmul.f32 %v19, %v59
    %69 = vset.pattern.permute.xlu0 0
    %70 = vperm.xlu0 %69, %v64
    %v71 = vpop.permute.xlu0 %70
    %74 = vset.pattern.permute.xlu0 0
    %75 = vperm.xlu0 %74, %v65
    %v76 = vpop.permute.xlu0 %75
    %79 = vset.pattern.permute.xlu0 0
    %80 = vperm.xlu0 %79, %v66
    %v81 = vpop.permute.xlu0 %80
    %84 = vset.pattern.permute.xlu0 0
    %85 = vperm.xlu0 %84, %v67
    %v86 = vpop.permute.xlu0 %85
    %v89 = vlaneseq
    %v90 = vshrl.u32 %v89, 7
    %v91 = vsub.s32 0, %v90
    %v92 = vrot.slane %v26, %v91
    %v94 = vmul.f32 %v71, %v92
    %v95 = vmul.f32 %v76, %v92
    %v96 = vmul.f32 %v81, %v92
    %v97 = vmul.f32 %v86, %v92
    %99 = vset.pattern.permute.xlu0 2
    %100 = vperm.xlu0 %99, %v16
    %v101 = vpop.permute.xlu0 %100
    %104 = vset.pattern.permute.xlu0 2
    %105 = vperm.xlu0 %104, %v17
    %v106 = vpop.permute.xlu0 %105
    %109 = vset.pattern.permute.xlu0 2
    %110 = vperm.xlu0 %109, %v18
    %v111 = vpop.permute.xlu0 %110
    %114 = vset.pattern.permute.xlu0 2
    %115 = vperm.xlu0 %114, %v19
    %v116 = vpop.permute.xlu0 %115
    %v118 = vadd.f32 %v94, %v101
    %v119 = vadd.f32 %v95, %v106
    %v120 = vadd.f32 %v96, %v111
    %v121 = vadd.f32 %v97, %v116
    %v122 = vmul.f32 %v118, 0.5
    %v123 = vmul.f32 %v119, 0.5
    %v124 = vmul.f32 %v120, 0.5
    %v125 = vmul.f32 %v121, 0.5
    %v126 = vtanh.pop %v122
    %v127 = vtanh.pop %v123
    %v128 = vtanh.pop %v124
    %v129 = vtanh.pop %v125
    %v130 = vmul.f32 %v126, 0.5
    %v131 = vmul.f32 %v127, 0.5
    %v132 = vmul.f32 %v128, 0.5
    %v133 = vmul.f32 %v129, 0.5
    %v134 = vadd.f32 %v130, 0.5
    %v135 = vadd.f32 %v131, 0.5
    %v136 = vadd.f32 %v132, 0.5
    %v137 = vadd.f32 %v133, 0.5
    %v138 = vld [vmem:[%s2] sm:$0xff]
    %v139 = vld [vmem:[%s2 + $0x8] sm:$0xff]
    %v140 = vld [vmem:[%s2 + $0x10] sm:$0xff]
    %v141 = vld [vmem:[%s2 + $0x18] sm:$0xff]
    %vm142 = vcmask 261120
    %v144 = vsel %vm142, %v138, 0
    %v147 = vsel %vm142, %v139, 0
    %v150 = vsel %vm142, %v140, 0
    %v153 = vsel %vm142, %v141, 0
    %155 = vmatprep.subr.mxu0 0.0
    %156 = vmatpush1.msra.mxu0 %v134
    %157 = vmatprep.subr.mxu0 0.0
    %158 = vmatpush1.msra.mxu0 %v135
    %159 = vmatprep.subr.mxu0 0.0
    %160 = vmatpush1.msra.mxu0 %v136
    %161 = vmatprep.subr.mxu0 0.0
    %162 = vmatpush1.msra.mxu0 %v137
    %163 = vmatprep.subr.mxu0 0.0
    %164 = vmatpush1.msra.mxu0 0.0
    %165 = vmatprep.subr.mxu0 0.0
    %166 = vmatpush1.msra.mxu0 0.0
    %167 = vmatprep.subr.mxu0 0.0
    %168 = vmatpush1.msra.mxu0 0.0
    %169 = vmatprep.subr.mxu0 0.0
    %170 = vmatpush1.msra.mxu0 0.0
    %171 = vmatprep.subr.mxu0 0.0
    %172 = vmatpush1.msra.mxu0 0.0
    %173 = vmatprep.subr.mxu0 0.0
    %174 = vmatpush1.msra.mxu0 0.0
    %175 = vmatprep.subr.mxu0 0.0
    %176 = vmatpush1.msra.mxu0 0.0
    %177 = vmatprep.subr.mxu0 0.0
    %178 = vmatpush1.msra.mxu0 0.0
    %179 = vmatprep.subr.mxu0 0.0
    %180 = vmatpush1.msra.mxu0 0.0
    %181 = vmatprep.subr.mxu0 0.0
    %182 = vmatpush1.msra.mxu0 0.0
    %183 = vmatprep.subr.mxu0 0.0
    %184 = vmatpush1.msra.mxu0 0.0
    %185 = vmatprep.subr.mxu0 0.0
    %186 = vmatpush1.msra.mxu0 0.0
    %187 = vmatprep.subr.mxu0 0.0
    %188 = vmatpush1.msra.mxu0 0.0
    %189 = vmatprep.subr.mxu0 0.0
    %190 = vmatpush1.msra.mxu0 0.0
    %191 = vmatprep.subr.mxu0 0.0
    %192 = vmatpush1.msra.mxu0 0.0
    %193 = vmatprep.subr.mxu0 0.0
    %194 = vmatpush1.msra.mxu0 0.0
    %195 = vmatprep.subr.mxu0 0.0
    %196 = vmatpush1.msra.mxu0 0.0
    %197 = vmatprep.subr.mxu0 0.0
    %198 = vmatpush1.msra.mxu0 0.0
    %199 = vmatprep.subr.mxu0 0.0
    %200 = vmatpush1.msra.mxu0 0.0
    %201 = vmatprep.subr.mxu0 0.0
    %202 = vmatpush1.msra.mxu0 0.0
    %203 = vmatprep.subr.mxu0 0.0
    %204 = vmatpush1.msra.mxu0 0.0
    %205 = vmatprep.subr.mxu0 0.0
    %206 = vmatpush1.msra.mxu0 0.0
    %207 = vmatprep.subr.mxu0 0.0
    %208 = vmatpush1.msra.mxu0 0.0
    %209 = vmatprep.subr.mxu0 0.0
    %210 = vmatpush1.msra.mxu0 0.0
    %211 = vmatprep.subr.mxu0 0.0
    %212 = vmatpush1.msra.mxu0 0.0
    %213 = vmatprep.subr.mxu0 0.0
    %214 = vmatpush1.msra.mxu0 0.0
    %215 = vmatprep.subr.mxu0 0.0
    %216 = vmatpush1.msra.mxu0 0.0
    %217 = vmatprep.subr.mxu0 0.0
    %218 = vmatpush1.msra.mxu0 0.0
    %219 = vmatprep.mubr.f32.mxu0 0.0
    %220 = vmatmul.mubr.f32.gmra.mrb[0].mxu0 %v144
    %v221 = vpop.f32.mrb[0].mxu0
    %v222 = vadd.f32 0.0, %v221
    %v223 = vpop.f32.mrb[0].mxu0
    %224 = vmatprep.mubr.f32.mxu0 0.0
    %225 = vmatmul.mubr.f32.gmra.mrb[0].mxu0 %v147
    %v226 = vpop.f32.mrb[0].mxu0
    %v227 = vadd.f32 0.0, %v226
    %v228 = vpop.f32.mrb[0].mxu0
    %229 = vmatprep.mubr.f32.mxu0 0.0
    %230 = vmatmul.mubr.f32.gmra.mrb[0].mxu0 %v150
    %v231 = vpop.f32.mrb[0].mxu0
    %v232 = vadd.f32 0.0, %v231
    %v233 = vpop.f32.mrb[0].mxu0
    %234 = vmatprep.mubr.f32.mxu0 0.0
    %235 = vmatmul.mubr.f32.gmra.mrb[0].mxu0 %v153
    %v236 = vpop.f32.mrb[0].mxu0
    %v237 = vadd.f32 0.0, %v236
    %v238 = vpop.f32.mrb[0].mxu0
    %239 = vdwg.mxu0
    %vm240 = vcmask 523264
    %v241 = vsel %vm240, %v222, 0.0
    %242 = vadd.xlane.f32.xlu0 %v241
    %v243 = vpop.xlane.xlu0 %242
    %v244 = vsel %vm240, %v227, 0.0
    %245 = vadd.xlane.f32.xlu0 %v244
    %v246 = vpop.xlane.xlu0 %245
    %v247 = vsel %vm240, %v232, 0.0
    %248 = vadd.xlane.f32.xlu0 %v247
    %v249 = vpop.xlane.xlu0 %248
    %v250 = vsel %vm240, %v237, 0.0
    %251 = vadd.xlane.f32.xlu0 %v250
    %v252 = vpop.xlane.xlu0 %251
    %v253 = vmul.f32 %v243, 0.015625
    %v254 = vmul.f32 %v246, 0.015625
    %v255 = vmul.f32 %v249, 0.015625
    %v256 = vmul.f32 %v252, 0.015625
    %v257 = vsub.f32 %v222, %v253
    %v258 = vsub.f32 %v227, %v254
    %v259 = vsub.f32 %v232, %v255
    %v260 = vsub.f32 %v237, %v256
    %v261 = vmul.f32 %v257, %v257
    %v262 = vmul.f32 %v258, %v258
    %v263 = vmul.f32 %v259, %v259
    %v264 = vmul.f32 %v260, %v260
    %v265 = vsel %vm240, %v261, 0.0
    %266 = vadd.xlane.f32.xlu0 %v265
    %v267 = vpop.xlane.xlu0 %266
    %v268 = vsel %vm240, %v262, 0.0
    %269 = vadd.xlane.f32.xlu0 %v268
    %v270 = vpop.xlane.xlu0 %269
    %v271 = vsel %vm240, %v263, 0.0
    %272 = vadd.xlane.f32.xlu0 %v271
    %v273 = vpop.xlane.xlu0 %272
    %v274 = vsel %vm240, %v264, 0.0
    %275 = vadd.xlane.f32.xlu0 %v274
    %v276 = vpop.xlane.xlu0 %275
    %v277 = vmul.f32 %v267, 0.015625
    %v278 = vmul.f32 %v270, 0.015625
    %v279 = vmul.f32 %v273, 0.015625
    %v280 = vmul.f32 %v276, 0.015625
    %v281 = vadd.f32 %v277, 1e-05
    %v282 = vadd.f32 %v278, 1e-05
    %v283 = vadd.f32 %v279, 1e-05
    %v284 = vadd.f32 %v280, 1e-05
    %v285 = vrsqrt.pop %v281
    %v286 = vrsqrt.pop %v282
    %v287 = vrsqrt.pop %v283
    %v288 = vrsqrt.pop %v284
    %v289 = vmul.f32 %v16, %v285
    %v290 = vmul.f32 %v17, %v286
    %v291 = vmul.f32 %v18, %v287
    %v292 = vmul.f32 %v19, %v288
    %294 = vset.pattern.permute.xlu0 3
    %295 = vperm.xlu0 %294, %v289
    %v296 = vpop.permute.xlu0 %295
    %299 = vset.pattern.permute.xlu0 3
    %300 = vperm.xlu0 %299, %v290
    %v301 = vpop.permute.xlu0 %300
    %304 = vset.pattern.permute.xlu0 3
    %305 = vperm.xlu0 %304, %v291
    %v306 = vpop.permute.xlu0 %305
    %309 = vset.pattern.permute.xlu0 3
    %310 = vperm.xlu0 %309, %v292
    %v311 = vpop.permute.xlu0 %310
    %v313 = vmul.f32 %v257, %v296
    %v314 = vmul.f32 %v258, %v301
    %v315 = vmul.f32 %v259, %v306
    %v316 = vmul.f32 %v260, %v311
    %317 = vset.pattern.permute.xlu0 4
    %318 = vperm.xlu0 %317, %v16
    %v319 = vpop.permute.xlu0 %318
    %321 = vset.pattern.permute.xlu0 4
    %322 = vperm.xlu0 %321, %v17
    %v323 = vpop.permute.xlu0 %322
    %325 = vset.pattern.permute.xlu0 4
    %326 = vperm.xlu0 %325, %v18
    %v327 = vpop.permute.xlu0 %326
    %329 = vset.pattern.permute.xlu0 4
    %330 = vperm.xlu0 %329, %v19
    %v331 = vpop.permute.xlu0 %330
    %v333 = vadd.f32 %v313, %v319
    %v334 = vadd.f32 %v314, %v323
    %v335 = vadd.f32 %v315, %v327
    %v336 = vadd.f32 %v316, %v331
    %v337 = vmul.f32 %v333, 0.5
    %v338 = vmul.f32 %v334, 0.5
    %v339 = vmul.f32 %v335, 0.5
    %v340 = vmul.f32 %v336, 0.5
    %v341 = vtanh.pop %v337
    %v342 = vtanh.pop %v338
    %v343 = vtanh.pop %v339
    %v344 = vtanh.pop %v340
    %v345 = vmul.f32 %v341, 0.5
    %v346 = vmul.f32 %v342, 0.5
    %v347 = vmul.f32 %v343, 0.5
    %v348 = vmul.f32 %v344, 0.5
    %v349 = vadd.f32 %v345, 0.5
    %v350 = vadd.f32 %v346, 0.5
    %v351 = vadd.f32 %v347, 0.5
    %v352 = vadd.f32 %v348, 0.5
    %353 = vset.pattern.permute.xlu0 5
    %354 = vperm.xlu0 %353, %v16
    %v355 = vpop.permute.xlu0 %354
    %357 = vset.pattern.permute.xlu0 5
    %358 = vperm.xlu0 %357, %v17
    %v359 = vpop.permute.xlu0 %358
    %361 = vset.pattern.permute.xlu0 5
    %362 = vperm.xlu0 %361, %v18
    %v363 = vpop.permute.xlu0 %362
    %365 = vset.pattern.permute.xlu0 5
    %366 = vperm.xlu0 %365, %v19
    %v367 = vpop.permute.xlu0 %366
    %v369 = vmul.f32 %v349, %v355
    %v370 = vmul.f32 %v350, %v359
    %v371 = vmul.f32 %v351, %v363
    %v372 = vmul.f32 %v352, %v367
    %v373 = vsel %vm240, %v369, 0.0
    %v374 = vsel %vm240, %v370, 0.0
    %v375 = vadd.f32 %v373, %v374
    %v376 = vsel %vm240, %v371, 0.0
    %v377 = vadd.f32 %v375, %v376
    %v378 = vsel %vm240, %v372, 0.0
    %v379 = vadd.f32 %v377, %v378
    %v380 = vrot.slane %v379, 4
    %v381 = vadd.f32 %v379, %v380
    %v382 = vrot.slane %v381, 2
    %v383 = vadd.f32 %v381, %v382
    %v384 = vrot.slane %v383, 1
    %v385 = vadd.f32 %v383, %v384
    %387 = vset.pattern.permute.xlu0 6
    %388 = vperm.xlu0 %387, %v20
    %v389 = vpop.permute.xlu0 %388
    %v391 = vadd.f32 %v385, %v389
    %v392 = vmul.f32 %v391, 0.5
    %v393 = vtanh.pop %v392
    %v394 = vmul.f32 %v393, 0.5
    %v395 = vadd.f32 %v394, 0.5
    %396 = vst.msk [vmem:[#allocation2] sm:$0x1] %vm21, %v395
    // Predicated region
    $region14: #{tpu_custom_call.1} parent=1 // pred_check
      _
    $region15: #{tpu_custom_call.1} parent=1 // pred_check_branch
      %398 = sbr.rel (0) target = $region17
    $region16: #{tpu_custom_call.1} parent=1 // pred_region
      %s400 = ssub.s32 16, 16
      %401 = vsyncadd [#allocation3], %s400
      %s403 = sshll.u32 [#allocation2], 4
      %s404 = int_to_ptr.vmem [resolvable:$true] %s403
      %406 = dma.vmem_to_hbm [thread:$0]  %s404, 16, %s3, [#allocation3]
    $region17: #{tpu_custom_call.1} parent=1 // pred_fallthru
      _
    // Predicated region
    $region18: #{tpu_custom_call.1} parent=1 // pred_check
      _
    $region19: #{tpu_custom_call.1} parent=1 // pred_check_branch
      %408 = sbr.rel (0) target = $region21
    $region20: #{tpu_custom_call.1} parent=1 // pred_region
      %409 = dma.done [#allocation3], 16
    $region21: #{tpu_custom_call.1} parent=1 // pred_fallthru
      _
    %410 = vsyncpa [#allocation3], 1

</llo_original>
